<compile_context>
chip_gen: v5e
topology: v5e:2x2
jax: 0.10.0
libtpu: 0.0.40
codegen_flags: <defaults>
</compile_context>

<pallas_src>
import jax
import jax.numpy as jnp
from jax.experimental import pallas as pl
from jax.experimental.pallas import tpu as pltpu

K_LATENT = 32                     # latent dim "k" of the Decoder
H1, H2, H3 = 50, 250, 784         # logical (PyTorch) feature dims
H1P, H2P = 128, 256               # lane-padded hidden dims; output kept at 784 (full-dim block)
IMG = 28
MAX_TB = 2048                     # batch-tile cap (with explicit vmem_limit_bytes below)
MIN_SPLIT_B = 256                 # above this, force >=2 grid steps (v7x megacore)
VMEM_LIMIT_BYTES = 48 << 20       # fits TB=2048 f32 output double-buffer + temps everywhere


def _cdiv(a, b):
    return -(-a // b)


def _round_up(n, m):
    return _cdiv(n, m) * m


def _decoder_kernel(x_ref, w1_ref, b1_ref, w2_ref, b2_ref, w3_ref, b3_ref, o_ref):
    # One batch tile per grid step; weights/biases have constant index maps, so they are
    # DMA'd once and stay resident in VMEM across the whole grid.  Activations are cast
    # to bf16 so every matmul is a native bf16 MXU pass with f32 accumulation.
    x = x_ref[...].astype(jnp.bfloat16)
    h1 = jnp.dot(x, w1_ref[...], preferred_element_type=jnp.float32) + b1_ref[...]
    h1 = jnp.maximum(h1, 0.0).astype(jnp.bfloat16)
    h2 = jnp.dot(h1, w2_ref[...], preferred_element_type=jnp.float32) + b2_ref[...]
    h2 = jnp.maximum(h2, 0.0).astype(jnp.bfloat16)
    h3 = jnp.dot(h2, w3_ref[...], preferred_element_type=jnp.float32) + b3_ref[...]
    o_ref[...] = jnp.maximum(h3, 0.0)


def prepare_decoder_params(w1, b1, w2, b2, w3, b3):
    """One-time preprocessing (NOT in the per-call forward path): pad hidden feature dims
    to lane-dense multiples of 128 (50->128, 250->256) and cast weights to bf16.
    The fc3 output dim stays at 784 (no output-column padding)."""
    w1p = jnp.zeros((w1.shape[0], H1P), jnp.bfloat16).at[:, :H1].set(w1.astype(jnp.bfloat16))
    b1p = jnp.zeros((1, H1P), jnp.float32).at[:, :H1].set(b1.reshape(1, H1).astype(jnp.float32))
    w2p = jnp.zeros((H1P, H2P), jnp.bfloat16).at[:H1, :H2].set(w2.astype(jnp.bfloat16))
    b2p = jnp.zeros((1, H2P), jnp.float32).at[:, :H2].set(b2.reshape(1, H2).astype(jnp.float32))
    w3p = jnp.zeros((H2P, H3), jnp.bfloat16).at[:H2, :].set(w3.astype(jnp.bfloat16))
    b3p = b3.reshape(1, H3).astype(jnp.float32)
    return w1p, b1p, w2p, b2p, w3p, b3p


@jax.jit
def decoder_forward(x, w1p, b1p, w2p, b2p, w3p, b3p):
    B, K = x.shape

    # Near-equal batch tiles, rounded to 16 rows (bf16 sublane packing); padding per tile
    # is bounded to <16 rows.  For mid/large batches force >=2 steps so both v7x cores
    # get a share of the (parallel) batch axis.
    n_tiles = _cdiv(B, MAX_TB)
    if B > MIN_SPLIT_B:
        n_tiles = max(n_tiles, 2)
    TB = _round_up(_cdiv(B, n_tiles), 16)
    B_pad = n_tiles * TB
    grid = (n_tiles,)

    xp = x if B_pad == B else jnp.pad(x, ((0, B_pad - B), (0, 0)))

    flops = 2 * B_pad * (K * H1P + H1P * H2P + H2P * H3)
    bytes_accessed = (
        B_pad * K * 4                                    # x (f32)
        + (w1p.size + w2p.size + w3p.size) * 2           # bf16 weights (resident, read once)
        + (b1p.size + b2p.size + b3p.size) * 4           # f32 biases
        + B_pad * H3 * 4                                 # f32 output (784-wide, no padding)
    )

    out_flat = pl.pallas_call(
        _decoder_kernel,
        out_shape=jax.ShapeDtypeStruct((B_pad, H3), jnp.float32),
        grid=grid,
        in_specs=[
            pl.BlockSpec((TB, K), lambda i: (i, 0)),        # x     (batch-tiled)
            pl.BlockSpec((K, H1P), lambda i: (0, 0)),       # w1    (resident)
            pl.BlockSpec((1, H1P), lambda i: (0, 0)),       # b1    (resident)
            pl.BlockSpec((H1P, H2P), lambda i: (0, 0)),     # w2    (resident)
            pl.BlockSpec((1, H2P), lambda i: (0, 0)),       # b2    (resident)
            pl.BlockSpec((H2P, H3), lambda i: (0, 0)),      # w3    (resident, 784 = full dim)
            pl.BlockSpec((1, H3), lambda i: (0, 0)),        # b3    (resident, 784 = full dim)
        ],
        out_specs=pl.BlockSpec((TB, H3), lambda i: (i, 0)),  # last dim == full array dim (784)
        compiler_params=pltpu.CompilerParams(
            dimension_semantics=("parallel",),
            vmem_limit_bytes=VMEM_LIMIT_BYTES,
        ),
        cost_estimate=pl.CostEstimate(
            flops=flops, transcendentals=0, bytes_accessed=bytes_accessed
        ),
    )(xp, w1p, b1p, w2p, b2p, w3p, b3p)

    # Slice away batch padding only (feature dim is already exactly 784), then the
    # torch-style row-major view to NCHW — a free bitcast when B_pad == B.
    out = out_flat if B_pad == B else out_flat[:B]
    return out.reshape(B, 1, IMG, IMG)


def init_params(key, k=K_LATENT):
    # Deterministic synthetic init (shapes match nn.Linear(k,50), (50,250), (250,784)).
    # Weights are stored (in, out), i.e. transposed relative to PyTorch's (out, in).
    ks = jax.random.split(key, 6)
    scale = lambda fan_in: 1.0 / jnp.sqrt(jnp.float32(fan_in))
    w1 = jax.random.uniform(ks[0], (k, H1), jnp.float32, -1, 1) * scale(k)
    b1 = jax.random.uniform(ks[1], (1, H1), jnp.float32, -1, 1) * scale(k)
    w2 = jax.random.uniform(ks[2], (H1, H2), jnp.float32, -1, 1) * scale(H1)
    b2 = jax.random.uniform(ks[3], (1, H2), jnp.float32, -1, 1) * scale(H1)
    w3 = jax.random.uniform(ks[4], (H2, H3), jnp.float32, -1, 1) * scale(H2)
    b3 = jax.random.uniform(ks[5], (1, H3), jnp.float32, -1, 1) * scale(H2)
    return w1, b1, w2, b2, w3, b3


def reference_forward(x, w1, b1, w2, b2, w3, b3):
    # Pure-JAX f32 reference of the PyTorch forward.
    h1 = jnp.maximum(x @ w1 + b1, 0.0)
    h2 = jnp.maximum(h1 @ w2 + b2, 0.0)
    h3 = jnp.maximum(h2 @ w3 + b3, 0.0)
    return h3.reshape(x.shape[0], 1, IMG, IMG)


if __name__ == "__main__":
    key = jax.random.PRNGKey(0)
    k_x, k_p = jax.random.split(key)
    B = 8
    x = jax.random.normal(k_x, (B, K_LATENT), jnp.float32)
    raw_params = init_params(k_p)

    # One-time weight preprocessing (pad + bf16 cast), outside the per-call forward path.
    params = prepare_decoder_params(*raw_params)
    params = tuple(jax.block_until_ready(p) for p in params)

    out = decoder_forward(x, *params)
    out = jax.block_until_ready(out)

    ref = reference_forward(x, *raw_params)
    assert out.shape == (B, 1, IMG, IMG), out.shape
    # Weights/activations run through the MXU in bf16 (f32 accumulation), so allow
    # ~1e-2-level deviation vs the pure-f32 reference.
    assert jnp.allclose(out, ref, atol=8e-2, rtol=8e-2), "mismatch vs reference"
    print("KERNEL_OK")
</pallas_src>

<mosaic_0001>
module attributes {stable_mosaic.version = 11 : i64} {
  func.func @_decoder_kernel(%arg0: i32, %arg1: memref<16x32xf32, #tpu.memory_space<vmem>>, %arg2: memref<32x128xbf16, #tpu.memory_space<vmem>>, %arg3: memref<1x128xf32, #tpu.memory_space<vmem>>, %arg4: memref<128x256xbf16, #tpu.memory_space<vmem>>, %arg5: memref<1x256xf32, #tpu.memory_space<vmem>>, %arg6: memref<256x784xbf16, #tpu.memory_space<vmem>>, %arg7: memref<1x784xf32, #tpu.memory_space<vmem>>, %arg8: memref<16x784xf32, #tpu.memory_space<vmem>>) attributes {dimension_semantics = [#tpu.dimension_semantics<parallel>], iteration_bounds = array<i64: 1>, scalar_prefetch = 0 : i64, scratch_operands = 0 : i64, tpu.core_type = #tpu.core_type<tc>, window_params = [{transform_indices = @transform_0, window_bounds = array<i64: 16, 32>}, {pipeline_mode = #tpu.pipeline_mode<synchronous>, transform_indices = @transform_1, window_bounds = array<i64: 32, 128>}, {pipeline_mode = #tpu.pipeline_mode<synchronous>, transform_indices = @transform_2, window_bounds = array<i64: 1, 128>}, {pipeline_mode = #tpu.pipeline_mode<synchronous>, transform_indices = @transform_3, window_bounds = array<i64: 128, 256>}, {pipeline_mode = #tpu.pipeline_mode<synchronous>, transform_indices = @transform_4, window_bounds = array<i64: 1, 256>}, {pipeline_mode = #tpu.pipeline_mode<synchronous>, transform_indices = @transform_5, window_bounds = array<i64: 256, 784>}, {pipeline_mode = #tpu.pipeline_mode<synchronous>, transform_indices = @transform_6, window_bounds = array<i64: 1, 784>}, {transform_indices = @transform_7, window_bounds = array<i64: 16, 784>}]} {
    %c0 = arith.constant 0 : index
    %c0_0 = arith.constant 0 : index
    %0 = vector.load %arg1[%c0, %c0_0] : memref<16x32xf32, #tpu.memory_space<vmem>>, vector<16x32xf32>
    %1 = arith.truncf %0 : vector<16x32xf32> to vector<16x32xbf16>
    %c0_1 = arith.constant 0 : index
    %c0_2 = arith.constant 0 : index
    %2 = vector.load %arg2[%c0_1, %c0_2] : memref<32x128xbf16, #tpu.memory_space<vmem>>, vector<32x128xbf16>
    %cst = arith.constant dense<0.000000e+00> : vector<16x128xf32>
    %3 = tpu.matmul %1, %2, %cst {dimension_numbers = #tpu.dot_dimension_numbers<[1], [0], [0], [1], [0, 0, 1, 1], [], []>} : vector<16x32xbf16>, vector<32x128xbf16>, vector<16x128xf32> -> vector<16x128xf32>
    %c0_3 = arith.constant 0 : index
    %c0_4 = arith.constant 0 : index
    %4 = vector.load %arg3[%c0_3, %c0_4] : memref<1x128xf32, #tpu.memory_space<vmem>>, vector<1x128xf32>
    %5 = vector.broadcast %4 : vector<1x128xf32> to vector<16x128xf32>
    %6 = arith.addf %3, %5 : vector<16x128xf32>
    %cst_5 = arith.constant 0.000000e+00 : f32
    %7 = vector.broadcast %cst_5 : f32 to vector<16x128xf32>
    %8 = arith.maximumf %6, %7 : vector<16x128xf32>
    %9 = arith.truncf %8 : vector<16x128xf32> to vector<16x128xbf16>
    %c0_6 = arith.constant 0 : index
    %c0_7 = arith.constant 0 : index
    %10 = vector.load %arg4[%c0_6, %c0_7] : memref<128x256xbf16, #tpu.memory_space<vmem>>, vector<128x256xbf16>
    %cst_8 = arith.constant dense<0.000000e+00> : vector<16x256xf32>
    %11 = tpu.matmul %9, %10, %cst_8 {dimension_numbers = #tpu.dot_dimension_numbers<[1], [0], [0], [1], [0, 0, 1, 1], [], []>} : vector<16x128xbf16>, vector<128x256xbf16>, vector<16x256xf32> -> vector<16x256xf32>
    %c0_9 = arith.constant 0 : index
    %c0_10 = arith.constant 0 : index
    %12 = vector.load %arg5[%c0_9, %c0_10] : memref<1x256xf32, #tpu.memory_space<vmem>>, vector<1x256xf32>
    %13 = vector.broadcast %12 : vector<1x256xf32> to vector<16x256xf32>
    %14 = arith.addf %11, %13 : vector<16x256xf32>
    %cst_11 = arith.constant 0.000000e+00 : f32
    %15 = vector.broadcast %cst_11 : f32 to vector<16x256xf32>
    %16 = arith.maximumf %14, %15 : vector<16x256xf32>
    %17 = arith.truncf %16 : vector<16x256xf32> to vector<16x256xbf16>
    %c0_12 = arith.constant 0 : index
    %c0_13 = arith.constant 0 : index
    %18 = vector.load %arg6[%c0_12, %c0_13] : memref<256x784xbf16, #tpu.memory_space<vmem>>, vector<256x784xbf16>
    %cst_14 = arith.constant dense<0.000000e+00> : vector<16x784xf32>
    %19 = tpu.matmul %17, %18, %cst_14 {dimension_numbers = #tpu.dot_dimension_numbers<[1], [0], [0], [1], [0, 0, 1, 1], [], []>} : vector<16x256xbf16>, vector<256x784xbf16>, vector<16x784xf32> -> vector<16x784xf32>
    %c0_15 = arith.constant 0 : index
    %c0_16 = arith.constant 0 : index
    %20 = vector.load %arg7[%c0_15, %c0_16] : memref<1x784xf32, #tpu.memory_space<vmem>>, vector<1x784xf32>
    %21 = vector.broadcast %20 : vector<1x784xf32> to vector<16x784xf32>
    %22 = arith.addf %19, %21 : vector<16x784xf32>
    %cst_17 = arith.constant 0.000000e+00 : f32
    %23 = vector.broadcast %cst_17 : f32 to vector<16x784xf32>
    %24 = arith.maximumf %22, %23 : vector<16x784xf32>
    %c0_18 = arith.constant 0 : index
    %c0_19 = arith.constant 0 : index
    %25 = vector.load %arg8[%c0_18, %c0_19] : memref<16x784xf32, #tpu.memory_space<vmem>>, vector<16x784xf32>
    tpu.vector_store %arg8[%c0_18, %c0_19], %24 {strides = array<i32>} : memref<16x784xf32, #tpu.memory_space<vmem>>, vector<16x784xf32>,
    return
  }
  func.func @transform_0(%arg0: i32) -> (i32, i32) {
    %c0_i32 = arith.constant 0 : i32
    %c0_i32_0 = arith.constant 0 : i32
    return %arg0, %c0_i32 : i32, i32
  }
  func.func @transform_1(%arg0: i32) -> (i32, i32) {
    %c0_i32 = arith.constant 0 : i32
    %c0_i32_0 = arith.constant 0 : i32
    %c0_i32_1 = arith.constant 0 : i32
    return %c0_i32, %c0_i32_0 : i32, i32
  }
  func.func @transform_2(%arg0: i32) -> (i32, i32) {
    %c0_i32 = arith.constant 0 : i32
    %c0_i32_0 = arith.constant 0 : i32
    %c0_i32_1 = arith.constant 0 : i32
    return %c0_i32, %c0_i32_0 : i32, i32
  }
  func.func @transform_3(%arg0: i32) -> (i32, i32) {
    %c0_i32 = arith.constant 0 : i32
    %c0_i32_0 = arith.constant 0 : i32
    %c0_i32_1 = arith.constant 0 : i32
    return %c0_i32, %c0_i32_0 : i32, i32
  }
  func.func @transform_4(%arg0: i32) -> (i32, i32) {
    %c0_i32 = arith.constant 0 : i32
    %c0_i32_0 = arith.constant 0 : i32
    %c0_i32_1 = arith.constant 0 : i32
    return %c0_i32, %c0_i32_0 : i32, i32
  }
  func.func @transform_5(%arg0: i32) -> (i32, i32) {
    %c0_i32 = arith.constant 0 : i32
    %c0_i32_0 = arith.constant 0 : i32
    %c0_i32_1 = arith.constant 0 : i32
    return %c0_i32, %c0_i32_0 : i32, i32
  }
  func.func @transform_6(%arg0: i32) -> (i32, i32) {
    %c0_i32 = arith.constant 0 : i32
    %c0_i32_0 = arith.constant 0 : i32
    %c0_i32_1 = arith.constant 0 : i32
    return %c0_i32, %c0_i32_0 : i32, i32
  }
  func.func @transform_7(%arg0: i32) -> (i32, i32) {
    %c0_i32 = arith.constant 0 : i32
    %c0_i32_0 = arith.constant 0 : i32
    return %arg0, %c0_i32 : i32, i32
  }
}

</mosaic_0001>

<llo_original>
// kernel: decoder_forward.1
$region0: #{decoder_forward.1}
  #allocation0 [shape = 'u32[]', space=smem, size = 0x4, offset = 0x4, fixed_abs, tag = 'smem constant byte address 0x4 - core index']
  #allocation1 [shape = 'u32[72,128]{1,0:T(1,128)}', space=vmem, size = 0x9000, scoped, tag = 'internal scratch']
  %s0 = inlined_call_operand.vmem [shape: f32[16,32], index: 0, kind: input, shape index: {}]
  %s1 = inlined_call_operand.vmem [shape: bf16[32,128], index: 1, kind: input, shape index: {}]
  %s2 = inlined_call_operand.vmem [shape: f32[1,128], index: 2, kind: input, shape index: {}]
  %s3 = inlined_call_operand.vmem [shape: bf16[128,256], index: 3, kind: input, shape index: {}]
  %s4 = inlined_call_operand.vmem [shape: f32[1,256], index: 4, kind: input, shape index: {}]
  %s5 = inlined_call_operand.vmem [shape: bf16[256,784], index: 5, kind: input, shape index: {}]
  %s6 = inlined_call_operand.vmem [shape: f32[1,784], index: 6, kind: input, shape index: {}]
  %s7 = inlined_call_operand.vmem [shape: f32[16,784], index: 7, kind: output, shape index: {}]
  %s8 = sld [smem:[#allocation0]]
  $region38: #{decoder_forward.1} parent=0
    _
  %s10 = ssub.s32 1, %s8
  %s11 = scalar_select 0, %s10, %s8
  // Predicated region
  $region2: #{decoder_forward.1} parent=0 // pred_check
    _
  $region3: #{decoder_forward.1} parent=0 // pred_check_branch
    %13 = sbr.rel (0) target = $region5
  $region4: #{decoder_forward.1} parent=0 // pred_region
    _
  $region5: #{decoder_forward.1} parent=0 // pred_fallthru
    _
  // Predicated region
  $region6: #{decoder_forward.1} parent=0 // pred_check
    _
  $region7: #{decoder_forward.1} parent=0 // pred_check_branch
    %15 = sbr.rel (0) target = $region9
  $region8: #{decoder_forward.1} parent=0 // pred_region
    _
  $region9: #{decoder_forward.1} parent=0 // pred_fallthru
    _
  // Predicated region
  $region10: #{decoder_forward.1} parent=0 // pred_check
    _
  $region11: #{decoder_forward.1} parent=0 // pred_check_branch
    %17 = sbr.rel (0) target = $region13
  $region12: #{decoder_forward.1} parent=0 // pred_region
    _
  $region13: #{decoder_forward.1} parent=0 // pred_fallthru
    _
  // Predicated region
  $region14: #{decoder_forward.1} parent=0 // pred_check
    _
  $region15: #{decoder_forward.1} parent=0 // pred_check_branch
    %19 = sbr.rel (0) target = $region17
  $region16: #{decoder_forward.1} parent=0 // pred_region
    _
  $region17: #{decoder_forward.1} parent=0 // pred_fallthru
    _
  // Predicated region
  $region18: #{decoder_forward.1} parent=0 // pred_check
    _
  $region19: #{decoder_forward.1} parent=0 // pred_check_branch
    %21 = sbr.rel (0) target = $region21
  $region20: #{decoder_forward.1} parent=0 // pred_region
    _
  $region21: #{decoder_forward.1} parent=0 // pred_fallthru
    _
  // Predicated region
  $region22: #{decoder_forward.1} parent=0 // pred_check
    _
  $region23: #{decoder_forward.1} parent=0 // pred_check_branch
    %23 = sbr.rel (0) target = $region25
  $region24: #{decoder_forward.1} parent=0 // pred_region
    _
  $region25: #{decoder_forward.1} parent=0 // pred_fallthru
    _
  // Predicated region
  $region26: #{decoder_forward.1} parent=0 // pred_check
    _
  $region27: #{decoder_forward.1} parent=0 // pred_check_branch
    %25 = sbr.rel (0) target = $region29
  $region28: #{decoder_forward.1} parent=0 // pred_region
    _
  $region29: #{decoder_forward.1} parent=0 // pred_fallthru
    _
  %v27 = vld [vmem:[%s0] sm:$0xff]
  %v28 = vld [vmem:[%s0 + $0x8] sm:$0xff]
  %v29 = vpack.c.bf16 %v28, %v27
  %v30 = vld [vmem:[%s1] sm:$0xf]
  %v31 = vld [vmem:[%s1 + $0x4] sm:$0xf]
  %v32 = vld [vmem:[%s1 + $0x8] sm:$0xf]
  %v33 = vld [vmem:[%s1 + $0xc] sm:$0xf]
  %v34 = vld [vmem:[%s2] sm:$0x1]
  %v36 = vperm.slane %v34, 0
  %v42 = vunpack.c.l.b16 %v30
  %v43 = vunpack.c.l.b16 %v31
  %v44 = vunpack.c.l.b16 %v32
  %v45 = vunpack.c.l.b16 %v33
  %v46 = vpack.c.b16 %v43, %v42
  %v47 = vpack.c.b16 %v45, %v44
  %vm50 = vcmask 261120
  %v52 = vsel %vm50, %v29, 0
  %54 = vmatpush.bf16.msra.mxu0 0
  %55 = vmatpush.bf16.msra.mxu0 0
  %56 = vmatpush.bf16.msra.mxu0 0
  %57 = vmatpush.bf16.msra.mxu0 0
  %58 = vmatpush.bf16.msra.mxu0 0
  %59 = vmatpush.bf16.msra.mxu0 0
  %60 = vmatpush.bf16.msra.mxu0 %v47
  %61 = vmatpush.bf16.msra.mxu0 %v46
  %62 = vmatmul.bf16.gmra.mxu0 %v52
  %v63 = vpop.f32.mrf.mxu0
  %v64 = vadd.f32 %v36, %v63
  %v65 = vpop.f32.mrf.mxu0
  %v66 = vadd.f32 %v36, %v65
  %67 = vdwg.mxu0
  %v68 = vmax.f32 %v64, 0.0
  %v69 = vmax.f32 %v66, 0.0
  %v70 = vpack.c.bf16 %v69, %v68
  %v71 = vld [vmem:[%s3] sm:$0xff]
  %v72 = vld [vmem:[%s3 + $0x8] sm:$0xff]
  %v73 = vld [vmem:[%s3 + $0x10] sm:$0xff]
  %v74 = vld [vmem:[%s3 + $0x18] sm:$0xff]
  %v75 = vld [vmem:[%s3 + $0x20] sm:$0xff]
  %v76 = vld [vmem:[%s3 + $0x28] sm:$0xff]
  %v77 = vld [vmem:[%s3 + $0x30] sm:$0xff]
  %v78 = vld [vmem:[%s3 + $0x38] sm:$0xff]
  %v79 = vld [vmem:[%s3 + $0x40] sm:$0xff]
  %v80 = vld [vmem:[%s3 + $0x48] sm:$0xff]
  %v81 = vld [vmem:[%s3 + $0x50] sm:$0xff]
  %v82 = vld [vmem:[%s3 + $0x58] sm:$0xff]
  %v83 = vld [vmem:[%s3 + $0x60] sm:$0xff]
  %v84 = vld [vmem:[%s3 + $0x68] sm:$0xff]
  %v85 = vld [vmem:[%s3 + $0x70] sm:$0xff]
  %v86 = vld [vmem:[%s3 + $0x78] sm:$0xff]
  %v87 = vld [vmem:[%s4] sm:$0x3]
  %v89 = vperm.slane %v87, 0
  %v90 = vperm.slane %v87, 1
  %v109 = vunpack.c.l.b16 %v71
  %v110 = vunpack.c.h.b16 %v71
  %v111 = vunpack.c.l.b16 %v72
  %v112 = vunpack.c.h.b16 %v72
  %v113 = vunpack.c.l.b16 %v73
  %v114 = vunpack.c.h.b16 %v73
  %v115 = vunpack.c.l.b16 %v74
  %v116 = vunpack.c.h.b16 %v74
  %v117 = vunpack.c.l.b16 %v75
  %v118 = vunpack.c.h.b16 %v75
  %v119 = vunpack.c.l.b16 %v76
  %v120 = vunpack.c.h.b16 %v76
  %v121 = vunpack.c.l.b16 %v77
  %v122 = vunpack.c.h.b16 %v77
  %v123 = vunpack.c.l.b16 %v78
  %v124 = vunpack.c.h.b16 %v78
  %v125 = vunpack.c.l.b16 %v79
  %v126 = vunpack.c.h.b16 %v79
  %v127 = vunpack.c.l.b16 %v80
  %v128 = vunpack.c.h.b16 %v80
  %v129 = vunpack.c.l.b16 %v81
  %v130 = vunpack.c.h.b16 %v81
  %v131 = vunpack.c.l.b16 %v82
  %v132 = vunpack.c.h.b16 %v82
  %v133 = vunpack.c.l.b16 %v83
  %v134 = vunpack.c.h.b16 %v83
  %v135 = vunpack.c.l.b16 %v84
  %v136 = vunpack.c.h.b16 %v84
  %v137 = vunpack.c.l.b16 %v85
  %v138 = vunpack.c.h.b16 %v85
  %v139 = vunpack.c.l.b16 %v86
  %v140 = vunpack.c.h.b16 %v86
  %v141 = vpack.c.b16 %v111, %v109
  %v142 = vpack.c.b16 %v112, %v110
  %v143 = vpack.c.b16 %v115, %v113
  %v144 = vpack.c.b16 %v116, %v114
  %v145 = vpack.c.b16 %v119, %v117
  %v146 = vpack.c.b16 %v120, %v118
  %v147 = vpack.c.b16 %v123, %v121
  %v148 = vpack.c.b16 %v124, %v122
  %v149 = vpack.c.b16 %v127, %v125
  %v150 = vpack.c.b16 %v128, %v126
  %v151 = vpack.c.b16 %v131, %v129
  %v152 = vpack.c.b16 %v132, %v130
  %v153 = vpack.c.b16 %v135, %v133
  %v154 = vpack.c.b16 %v136, %v134
  %v155 = vpack.c.b16 %v139, %v137
  %v156 = vpack.c.b16 %v140, %v138
  %173 = vmatpush.bf16.msra.mxu0 %v155
  %174 = vmatpush.bf16.msra.mxu0 %v153
  %175 = vmatpush.bf16.msra.mxu0 %v151
  %176 = vmatpush.bf16.msra.mxu0 %v149
  %177 = vmatpush.bf16.msra.mxu0 %v147
  %178 = vmatpush.bf16.msra.mxu0 %v145
  %179 = vmatpush.bf16.msra.mxu0 %v143
  %180 = vmatpush.bf16.msra.mxu0 %v141
  %181 = vmatmul.bf16.gmra.mxu0 %v70
  %v182 = vpop.f32.mrf.mxu0
  %v183 = vadd.f32 %v89, %v182
  %v184 = vpop.f32.mrf.mxu0
  %v185 = vadd.f32 %v89, %v184
  %186 = vdwg.mxu0
  %187 = vmatpush.bf16.msra.mxu0 %v156
  %188 = vmatpush.bf16.msra.mxu0 %v154
  %189 = vmatpush.bf16.msra.mxu0 %v152
  %190 = vmatpush.bf16.msra.mxu0 %v150
  %191 = vmatpush.bf16.msra.mxu0 %v148
  %192 = vmatpush.bf16.msra.mxu0 %v146
  %193 = vmatpush.bf16.msra.mxu0 %v144
  %194 = vmatpush.bf16.msra.mxu0 %v142
  %195 = vmatmul.bf16.gmra.mxu0 %v70
  %v196 = vpop.f32.mrf.mxu0
  %v197 = vadd.f32 %v90, %v196
  %v198 = vpop.f32.mrf.mxu0
  %v199 = vadd.f32 %v90, %v198
  %200 = vdwg.mxu0
  %v201 = vmax.f32 %v183, 0.0
  %v202 = vmax.f32 %v197, 0.0
  %v203 = vmax.f32 %v185, 0.0
  %v204 = vmax.f32 %v199, 0.0
  %v205 = vpack.c.bf16 %v203, %v201
  %v206 = vpack.c.bf16 %v204, %v202
  %v207 = vld [vmem:[%s5] sm:$0xff]
  %v208 = vld [vmem:[%s5 + $0x8] sm:$0xff]
  %v209 = vld [vmem:[%s5 + $0x10] sm:$0xff]
  %v210 = vld [vmem:[%s5 + $0x18] sm:$0xf]
  %v211 = vld [vmem:[%s5 + $0x1c] sm:$0xff]
  %v212 = vld [vmem:[%s5 + $0x24] sm:$0xff]
  %v213 = vld [vmem:[%s5 + $0x2c] sm:$0xff]
  %v214 = vld [vmem:[%s5 + $0x34] sm:$0xf]
  %v215 = vld [vmem:[%s5 + $0x38] sm:$0xff]
  %v216 = vld [vmem:[%s5 + $0x40] sm:$0xff]
  %v217 = vld [vmem:[%s5 + $0x48] sm:$0xff]
  %v218 = vld [vmem:[%s5 + $0x50] sm:$0xf]
  %v219 = vld [vmem:[%s5 + $0x54] sm:$0xff]
  %v220 = vld [vmem:[%s5 + $0x5c] sm:$0xff]
  %v221 = vld [vmem:[%s5 + $0x64] sm:$0xff]
  %v222 = vld [vmem:[%s5 + $0x6c] sm:$0xf]
  %v223 = vld [vmem:[%s5 + $0x70] sm:$0xff]
  %v224 = vld [vmem:[%s5 + $0x78] sm:$0xff]
  %v225 = vld [vmem:[%s5 + $0x80] sm:$0xff]
  %v226 = vld [vmem:[%s5 + $0x88] sm:$0xf]
  %v227 = vld [vmem:[%s5 + $0x8c] sm:$0xff]
  %v228 = vld [vmem:[%s5 + $0x94] sm:$0xff]
  %v229 = vld [vmem:[%s5 + $0x9c] sm:$0xff]
  %v230 = vld [vmem:[%s5 + $0xa4] sm:$0xf]
  %v231 = vld [vmem:[%s5 + $0xa8] sm:$0xff]
  %v232 = vld [vmem:[%s5 + $0xb0] sm:$0xff]
  %v233 = vld [vmem:[%s5 + $0xb8] sm:$0xff]
  %v234 = vld [vmem:[%s5 + $0xc0] sm:$0xf]
  %v235 = vld [vmem:[%s5 + $0xc4] sm:$0xff]
  %v236 = vld [vmem:[%s5 + $0xcc] sm:$0xff]
  %v237 = vld [vmem:[%s5 + $0xd4] sm:$0xff]
  %v238 = vld [vmem:[%s5 + $0xdc] sm:$0xf]
  %v239 = vld [vmem:[%s5 + $0xe0] sm:$0xff]
  %v240 = vld [vmem:[%s5 + $0xe8] sm:$0xff]
  %v241 = vld [vmem:[%s5 + $0xf0] sm:$0xff]
  %v242 = vld [vmem:[%s5 + $0xf8] sm:$0xf]
  %v243 = vld [vmem:[%s5 + $0xfc] sm:$0xff]
  %v244 = vld [vmem:[%s5 + $0x104] sm:$0xff]
  %v245 = vld [vmem:[%s5 + $0x10c] sm:$0xff]
  %v246 = vld [vmem:[%s5 + $0x114] sm:$0xf]
  %v247 = vld [vmem:[%s5 + $0x118] sm:$0xff]
  %v248 = vld [vmem:[%s5 + $0x120] sm:$0xff]
  %v249 = vld [vmem:[%s5 + $0x128] sm:$0xff]
  %v250 = vld [vmem:[%s5 + $0x130] sm:$0xf]
  %v251 = vld [vmem:[%s5 + $0x134] sm:$0xff]
  %v252 = vld [vmem:[%s5 + $0x13c] sm:$0xff]
  %v253 = vld [vmem:[%s5 + $0x144] sm:$0xff]
  %v254 = vld [vmem:[%s5 + $0x14c] sm:$0xf]
  %v255 = vld [vmem:[%s5 + $0x150] sm:$0xff]
  %v256 = vld [vmem:[%s5 + $0x158] sm:$0xff]
  %v257 = vld [vmem:[%s5 + $0x160] sm:$0xff]
  %v258 = vld [vmem:[%s5 + $0x168] sm:$0xf]
  %v259 = vld [vmem:[%s5 + $0x16c] sm:$0xff]
  %v260 = vld [vmem:[%s5 + $0x174] sm:$0xff]
  %v261 = vld [vmem:[%s5 + $0x17c] sm:$0xff]
  %v262 = vld [vmem:[%s5 + $0x184] sm:$0xf]
  %v263 = vld [vmem:[%s5 + $0x188] sm:$0xff]
  %v264 = vld [vmem:[%s5 + $0x190] sm:$0xff]
  %v265 = vld [vmem:[%s5 + $0x198] sm:$0xff]
  %v266 = vld [vmem:[%s5 + $0x1a0] sm:$0xf]
  %v267 = vld [vmem:[%s5 + $0x1a4] sm:$0xff]
  %v268 = vld [vmem:[%s5 + $0x1ac] sm:$0xff]
  %v269 = vld [vmem:[%s5 + $0x1b4] sm:$0xff]
  %v270 = vld [vmem:[%s5 + $0x1bc] sm:$0xf]
  %v271 = vld [vmem:[%s5 + $0x1c0] sm:$0xff]
  %v272 = vld [vmem:[%s5 + $0x1c8] sm:$0xff]
  %v273 = vld [vmem:[%s5 + $0x1d0] sm:$0xff]
  %v274 = vld [vmem:[%s5 + $0x1d8] sm:$0xf]
  %v275 = vld [vmem:[%s5 + $0x1dc] sm:$0xff]
  %v276 = vld [vmem:[%s5 + $0x1e4] sm:$0xff]
  %v277 = vld [vmem:[%s5 + $0x1ec] sm:$0xff]
  %v278 = vld [vmem:[%s5 + $0x1f4] sm:$0xf]
  %v279 = vld [vmem:[%s5 + $0x1f8] sm:$0xff]
  %v280 = vld [vmem:[%s5 + $0x200] sm:$0xff]
  %v281 = vld [vmem:[%s5 + $0x208] sm:$0xff]
  %v282 = vld [vmem:[%s5 + $0x210] sm:$0xf]
  %v283 = vld [vmem:[%s5 + $0x214] sm:$0xff]
  %v284 = vld [vmem:[%s5 + $0x21c] sm:$0xff]
  %v285 = vld [vmem:[%s5 + $0x224] sm:$0xff]
  %v286 = vld [vmem:[%s5 + $0x22c] sm:$0xf]
  %v287 = vld [vmem:[%s5 + $0x230] sm:$0xff]
  %v288 = vld [vmem:[%s5 + $0x238] sm:$0xff]
  %v289 = vld [vmem:[%s5 + $0x240] sm:$0xff]
  %v290 = vld [vmem:[%s5 + $0x248] sm:$0xf]
  %v291 = vld [vmem:[%s5 + $0x24c] sm:$0xff]
  %v292 = vld [vmem:[%s5 + $0x254] sm:$0xff]
  %v293 = vld [vmem:[%s5 + $0x25c] sm:$0xff]
  %v294 = vld [vmem:[%s5 + $0x264] sm:$0xf]
  %v295 = vld [vmem:[%s5 + $0x268] sm:$0xff]
  %v296 = vld [vmem:[%s5 + $0x270] sm:$0xff]
  %v297 = vld [vmem:[%s5 + $0x278] sm:$0xff]
  %v298 = vld [vmem:[%s5 + $0x280] sm:$0xf]
  %v299 = vld [vmem:[%s5 + $0x284] sm:$0xff]
  %v300 = vld [vmem:[%s5 + $0x28c] sm:$0xff]
  %v301 = vld [vmem:[%s5 + $0x294] sm:$0xff]
  %v302 = vld [vmem:[%s5 + $0x29c] sm:$0xf]
  %v303 = vld [vmem:[%s5 + $0x2a0] sm:$0xff]
  %v304 = vld [vmem:[%s5 + $0x2a8] sm:$0xff]
  %v305 = vld [vmem:[%s5 + $0x2b0] sm:$0xff]
  %v306 = vld [vmem:[%s5 + $0x2b8] sm:$0xf]
  %v307 = vld [vmem:[%s5 + $0x2bc] sm:$0xff]
  %v308 = vld [vmem:[%s5 + $0x2c4] sm:$0xff]
  %v309 = vld [vmem:[%s5 + $0x2cc] sm:$0xff]
  %v310 = vld [vmem:[%s5 + $0x2d4] sm:$0xf]
  %v311 = vld [vmem:[%s5 + $0x2d8] sm:$0xff]
  %v312 = vld [vmem:[%s5 + $0x2e0] sm:$0xff]
  %v313 = vld [vmem:[%s5 + $0x2e8] sm:$0xff]
  %v314 = vld [vmem:[%s5 + $0x2f0] sm:$0xf]
  %v315 = vld [vmem:[%s5 + $0x2f4] sm:$0xff]
  %v316 = vld [vmem:[%s5 + $0x2fc] sm:$0xff]
  %v317 = vld [vmem:[%s5 + $0x304] sm:$0xff]
  %v318 = vld [vmem:[%s5 + $0x30c] sm:$0xf]
  %v319 = vld [vmem:[%s5 + $0x310] sm:$0xff]
  %v320 = vld [vmem:[%s5 + $0x318] sm:$0xff]
  %v321 = vld [vmem:[%s5 + $0x320] sm:$0xff]
  %v322 = vld [vmem:[%s5 + $0x328] sm:$0xf]
  %v323 = vld [vmem:[%s5 + $0x32c] sm:$0xff]
  %v324 = vld [vmem:[%s5 + $0x334] sm:$0xff]
  %v325 = vld [vmem:[%s5 + $0x33c] sm:$0xff]
  %v326 = vld [vmem:[%s5 + $0x344] sm:$0xf]
  %v327 = vld [vmem:[%s5 + $0x348] sm:$0xff]
  %v328 = vld [vmem:[%s5 + $0x350] sm:$0xff]
  %v329 = vld [vmem:[%s5 + $0x358] sm:$0xff]
  %v330 = vld [vmem:[%s5 + $0x360] sm:$0xf]
  %v331 = vld [vmem:[%s5 + $0x364] sm:$0xff]
  %v332 = vld [vmem:[%s5 + $0x36c] sm:$0xff]
  %v333 = vld [vmem:[%s5 + $0x374] sm:$0xff]
  %v334 = vld [vmem:[%s5 + $0x37c] sm:$0xf]
  %v335 = vld [vmem:[%s6] sm:$0x7f]
  %v337 = vperm.slane %v335, 0
  %v338 = vperm.slane %v335, 1
  %v339 = vperm.slane %v335, 2
  %v340 = vperm.slane %v335, 3
  %v341 = vperm.slane %v335, 4
  %v342 = vperm.slane %v335, 5
  %v343 = vperm.slane %v335, 6
  %v479 = vunpack.c.l.b16 %v207
  %v480 = vunpack.c.h.b16 %v207
  %v481 = vunpack.c.l.b16 %v208
  %v482 = vunpack.c.h.b16 %v208
  %v483 = vunpack.c.l.b16 %v209
  %v484 = vunpack.c.h.b16 %v209
  %v485 = vunpack.c.l.b16 %v210
  %v486 = vunpack.c.l.b16 %v211
  %v487 = vunpack.c.h.b16 %v211
  %v488 = vunpack.c.l.b16 %v212
  %v489 = vunpack.c.h.b16 %v212
  %v490 = vunpack.c.l.b16 %v213
  %v491 = vunpack.c.h.b16 %v213
  %v492 = vunpack.c.l.b16 %v214
  %v493 = vunpack.c.l.b16 %v215
  %v494 = vunpack.c.h.b16 %v215
  %v495 = vunpack.c.l.b16 %v216
  %v496 = vunpack.c.h.b16 %v216
  %v497 = vunpack.c.l.b16 %v217
  %v498 = vunpack.c.h.b16 %v217
  %v499 = vunpack.c.l.b16 %v218
  %v500 = vunpack.c.l.b16 %v219
  %v501 = vunpack.c.h.b16 %v219
  %v502 = vunpack.c.l.b16 %v220
  %v503 = vunpack.c.h.b16 %v220
  %v504 = vunpack.c.l.b16 %v221
  %v505 = vunpack.c.h.b16 %v221
  %v506 = vunpack.c.l.b16 %v222
  %v507 = vunpack.c.l.b16 %v223
  %v508 = vunpack.c.h.b16 %v223
  %v509 = vunpack.c.l.b16 %v224
  %v510 = vunpack.c.h.b16 %v224
  %v511 = vunpack.c.l.b16 %v225
  %v512 = vunpack.c.h.b16 %v225
  %v513 = vunpack.c.l.b16 %v226
  %v514 = vunpack.c.l.b16 %v227
  %v515 = vunpack.c.h.b16 %v227
  %v516 = vunpack.c.l.b16 %v228
  %v517 = vunpack.c.h.b16 %v228
  %v518 = vunpack.c.l.b16 %v229
  %v519 = vunpack.c.h.b16 %v229
  %v520 = vunpack.c.l.b16 %v230
  %v521 = vunpack.c.l.b16 %v231
  %v522 = vunpack.c.h.b16 %v231
  %v523 = vunpack.c.l.b16 %v232
  %v524 = vunpack.c.h.b16 %v232
  %v525 = vunpack.c.l.b16 %v233
  %v526 = vunpack.c.h.b16 %v233
  %v527 = vunpack.c.l.b16 %v234
  %v528 = vunpack.c.l.b16 %v235
  %v529 = vunpack.c.h.b16 %v235
  %v530 = vunpack.c.l.b16 %v236
  %v531 = vunpack.c.h.b16 %v236
  %v532 = vunpack.c.l.b16 %v237
  %v533 = vunpack.c.h.b16 %v237
  %v534 = vunpack.c.l.b16 %v238
  %v535 = vunpack.c.l.b16 %v239
  %v536 = vunpack.c.h.b16 %v239
  %v537 = vunpack.c.l.b16 %v240
  %v538 = vunpack.c.h.b16 %v240
  %v539 = vunpack.c.l.b16 %v241
  %v540 = vunpack.c.h.b16 %v241
  %v541 = vunpack.c.l.b16 %v242
  %v542 = vunpack.c.l.b16 %v243
  %v543 = vunpack.c.h.b16 %v243
  %v544 = vunpack.c.l.b16 %v244
  %v545 = vunpack.c.h.b16 %v244
  %v546 = vunpack.c.l.b16 %v245
  %v547 = vunpack.c.h.b16 %v245
  %v548 = vunpack.c.l.b16 %v246
  %v549 = vunpack.c.l.b16 %v247
  %v550 = vunpack.c.h.b16 %v247
  %v551 = vunpack.c.l.b16 %v248
  %v552 = vunpack.c.h.b16 %v248
  %v553 = vunpack.c.l.b16 %v249
  %v554 = vunpack.c.h.b16 %v249
  %v555 = vunpack.c.l.b16 %v250
  %v556 = vunpack.c.l.b16 %v251
  %v557 = vunpack.c.h.b16 %v251
  %v558 = vunpack.c.l.b16 %v252
  %v559 = vunpack.c.h.b16 %v252
  %v560 = vunpack.c.l.b16 %v253
  %v561 = vunpack.c.h.b16 %v253
  %v562 = vunpack.c.l.b16 %v254
  %v563 = vunpack.c.l.b16 %v255
  %v564 = vunpack.c.h.b16 %v255
  %v565 = vunpack.c.l.b16 %v256
  %v566 = vunpack.c.h.b16 %v256
  %v567 = vunpack.c.l.b16 %v257
  %v568 = vunpack.c.h.b16 %v257
  %v569 = vunpack.c.l.b16 %v258
  %v570 = vunpack.c.l.b16 %v259
  %v571 = vunpack.c.h.b16 %v259
  %v572 = vunpack.c.l.b16 %v260
  %v573 = vunpack.c.h.b16 %v260
  %v574 = vunpack.c.l.b16 %v261
  %v575 = vunpack.c.h.b16 %v261
  %v576 = vunpack.c.l.b16 %v262
  %v577 = vunpack.c.l.b16 %v263
  %v578 = vunpack.c.h.b16 %v263
  %v579 = vunpack.c.l.b16 %v264
  %v580 = vunpack.c.h.b16 %v264
  %v581 = vunpack.c.l.b16 %v265
  %v582 = vunpack.c.h.b16 %v265
  %v583 = vunpack.c.l.b16 %v266
  %v584 = vunpack.c.l.b16 %v267
  %v585 = vunpack.c.h.b16 %v267
  %v586 = vunpack.c.l.b16 %v268
  %v587 = vunpack.c.h.b16 %v268
  %v588 = vunpack.c.l.b16 %v269
  %v589 = vunpack.c.h.b16 %v269
  %v590 = vunpack.c.l.b16 %v270
  %v591 = vunpack.c.l.b16 %v271
  %v592 = vunpack.c.h.b16 %v271
  %v593 = vunpack.c.l.b16 %v272
  %v594 = vunpack.c.h.b16 %v272
  %v595 = vunpack.c.l.b16 %v273
  %v596 = vunpack.c.h.b16 %v273
  %v597 = vunpack.c.l.b16 %v274
  %v598 = vunpack.c.l.b16 %v275
  %v599 = vunpack.c.h.b16 %v275
  %v600 = vunpack.c.l.b16 %v276
  %v601 = vunpack.c.h.b16 %v276
  %v602 = vunpack.c.l.b16 %v277
  %v603 = vunpack.c.h.b16 %v277
  %v604 = vunpack.c.l.b16 %v278
  %v605 = vunpack.c.l.b16 %v279
  %v606 = vunpack.c.h.b16 %v279
  %v607 = vunpack.c.l.b16 %v280
  %v608 = vunpack.c.h.b16 %v280
  %v609 = vunpack.c.l.b16 %v281
  %v610 = vunpack.c.h.b16 %v281
  %v611 = vunpack.c.l.b16 %v282
  %v612 = vunpack.c.l.b16 %v283
  %v613 = vunpack.c.h.b16 %v283
  %v614 = vunpack.c.l.b16 %v284
  %v615 = vunpack.c.h.b16 %v284
  %v616 = vunpack.c.l.b16 %v285
  %v617 = vunpack.c.h.b16 %v285
  %v618 = vunpack.c.l.b16 %v286
  %v619 = vunpack.c.l.b16 %v287
  %v620 = vunpack.c.h.b16 %v287
  %v621 = vunpack.c.l.b16 %v288
  %v622 = vunpack.c.h.b16 %v288
  %v623 = vunpack.c.l.b16 %v289
  %v624 = vunpack.c.h.b16 %v289
  %v625 = vunpack.c.l.b16 %v290
  %v626 = vunpack.c.l.b16 %v291
  %v627 = vunpack.c.h.b16 %v291
  %v628 = vunpack.c.l.b16 %v292
  %v629 = vunpack.c.h.b16 %v292
  %v630 = vunpack.c.l.b16 %v293
  %v631 = vunpack.c.h.b16 %v293
  %v632 = vunpack.c.l.b16 %v294
  %v633 = vunpack.c.l.b16 %v295
  %v634 = vunpack.c.h.b16 %v295
  %v635 = vunpack.c.l.b16 %v296
  %v636 = vunpack.c.h.b16 %v296
  %v637 = vunpack.c.l.b16 %v297
  %v638 = vunpack.c.h.b16 %v297
  %v639 = vunpack.c.l.b16 %v298
  %v640 = vunpack.c.l.b16 %v299
  %v641 = vunpack.c.h.b16 %v299
  %v642 = vunpack.c.l.b16 %v300
  %v643 = vunpack.c.h.b16 %v300
  %v644 = vunpack.c.l.b16 %v301
  %v645 = vunpack.c.h.b16 %v301
  %v646 = vunpack.c.l.b16 %v302
  %v647 = vunpack.c.l.b16 %v303
  %v648 = vunpack.c.h.b16 %v303
  %v649 = vunpack.c.l.b16 %v304
  %v650 = vunpack.c.h.b16 %v304
  %v651 = vunpack.c.l.b16 %v305
  %v652 = vunpack.c.h.b16 %v305
  %v653 = vunpack.c.l.b16 %v306
  %v654 = vunpack.c.l.b16 %v307
  %v655 = vunpack.c.h.b16 %v307
  %v656 = vunpack.c.l.b16 %v308
  %v657 = vunpack.c.h.b16 %v308
  %v658 = vunpack.c.l.b16 %v309
  %v659 = vunpack.c.h.b16 %v309
  %v660 = vunpack.c.l.b16 %v310
  %v661 = vunpack.c.l.b16 %v311
  %v662 = vunpack.c.h.b16 %v311
  %v663 = vunpack.c.l.b16 %v312
  %v664 = vunpack.c.h.b16 %v312
  %v665 = vunpack.c.l.b16 %v313
  %v666 = vunpack.c.h.b16 %v313
  %v667 = vunpack.c.l.b16 %v314
  %v668 = vunpack.c.l.b16 %v315
  %v669 = vunpack.c.h.b16 %v315
  %v670 = vunpack.c.l.b16 %v316
  %v671 = vunpack.c.h.b16 %v316
  %v672 = vunpack.c.l.b16 %v317
  %v673 = vunpack.c.h.b16 %v317
  %v674 = vunpack.c.l.b16 %v318
  %v675 = vunpack.c.l.b16 %v319
  %v676 = vunpack.c.h.b16 %v319
  %v677 = vunpack.c.l.b16 %v320
  %v678 = vunpack.c.h.b16 %v320
  %v679 = vunpack.c.l.b16 %v321
  %v680 = vunpack.c.h.b16 %v321
  %v681 = vunpack.c.l.b16 %v322
  %v682 = vunpack.c.l.b16 %v323
  %v683 = vunpack.c.h.b16 %v323
  %v684 = vunpack.c.l.b16 %v324
  %v685 = vunpack.c.h.b16 %v324
  %v686 = vunpack.c.l.b16 %v325
  %v687 = vunpack.c.h.b16 %v325
  %v688 = vunpack.c.l.b16 %v326
  %v689 = vunpack.c.l.b16 %v327
  %v690 = vunpack.c.h.b16 %v327
  %v691 = vunpack.c.l.b16 %v328
  %v692 = vunpack.c.h.b16 %v328
  %v693 = vunpack.c.l.b16 %v329
  %v694 = vunpack.c.h.b16 %v329
  %v695 = vunpack.c.l.b16 %v330
  %v696 = vunpack.c.l.b16 %v331
  %v697 = vunpack.c.h.b16 %v331
  %v698 = vunpack.c.l.b16 %v332
  %v699 = vunpack.c.h.b16 %v332
  %v700 = vunpack.c.l.b16 %v333
  %v701 = vunpack.c.h.b16 %v333
  %v702 = vunpack.c.l.b16 %v334
  %v703 = vpack.c.b16 %v486, %v479
  %v704 = vpack.c.b16 %v487, %v480
  %v705 = vpack.c.b16 %v488, %v481
  %v706 = vpack.c.b16 %v489, %v482
  %v707 = vpack.c.b16 %v490, %v483
  %v708 = vpack.c.b16 %v491, %v484
  %v709 = vpack.c.b16 %v492, %v485
  %v710 = vpack.c.b16 %v500, %v493
  %v711 = vpack.c.b16 %v501, %v494
  %v712 = vpack.c.b16 %v502, %v495
  %v713 = vpack.c.b16 %v503, %v496
  %v714 = vpack.c.b16 %v504, %v497
  %v715 = vpack.c.b16 %v505, %v498
  %v716 = vpack.c.b16 %v506, %v499
  %v717 = vpack.c.b16 %v514, %v507
  %v718 = vpack.c.b16 %v515, %v508
  %v719 = vpack.c.b16 %v516, %v509
  %v720 = vpack.c.b16 %v517, %v510
  %v721 = vpack.c.b16 %v518, %v511
  %v722 = vpack.c.b16 %v519, %v512
  %v723 = vpack.c.b16 %v520, %v513
  %v724 = vpack.c.b16 %v528, %v521
  %v725 = vpack.c.b16 %v529, %v522
  %v726 = vpack.c.b16 %v530, %v523
  %v727 = vpack.c.b16 %v531, %v524
  %v728 = vpack.c.b16 %v532, %v525
  %v729 = vpack.c.b16 %v533, %v526
  %v730 = vpack.c.b16 %v534, %v527
  %v731 = vpack.c.b16 %v542, %v535
  %v732 = vpack.c.b16 %v543, %v536
  %v733 = vpack.c.b16 %v544, %v537
  %v734 = vpack.c.b16 %v545, %v538
  %v735 = vpack.c.b16 %v546, %v539
  %v736 = vpack.c.b16 %v547, %v540
  %v737 = vpack.c.b16 %v548, %v541
  %v738 = vpack.c.b16 %v556, %v549
  %v739 = vpack.c.b16 %v557, %v550
  %v740 = vpack.c.b16 %v558, %v551
  %v741 = vpack.c.b16 %v559, %v552
  %v742 = vpack.c.b16 %v560, %v553
  %v743 = vpack.c.b16 %v561, %v554
  %v744 = vpack.c.b16 %v562, %v555
  %v745 = vpack.c.b16 %v570, %v563
  %v746 = vpack.c.b16 %v571, %v564
  %v747 = vpack.c.b16 %v572, %v565
  %v748 = vpack.c.b16 %v573, %v566
  %v749 = vpack.c.b16 %v574, %v567
  %v750 = vpack.c.b16 %v575, %v568
  %v751 = vpack.c.b16 %v576, %v569
  %v752 = vpack.c.b16 %v584, %v577
  %v753 = vpack.c.b16 %v585, %v578
  %v754 = vpack.c.b16 %v586, %v579
  %v755 = vpack.c.b16 %v587, %v580
  %v756 = vpack.c.b16 %v588, %v581
  %v757 = vpack.c.b16 %v589, %v582
  %v758 = vpack.c.b16 %v590, %v583
  %v759 = vpack.c.b16 %v598, %v591
  %v760 = vpack.c.b16 %v599, %v592
  %v761 = vpack.c.b16 %v600, %v593
  %v762 = vpack.c.b16 %v601, %v594
  %v763 = vpack.c.b16 %v602, %v595
  %v764 = vpack.c.b16 %v603, %v596
  %v765 = vpack.c.b16 %v604, %v597
  %v766 = vpack.c.b16 %v612, %v605
  %v767 = vpack.c.b16 %v613, %v606
  %v768 = vpack.c.b16 %v614, %v607
  %v769 = vpack.c.b16 %v615, %v608
  %v770 = vpack.c.b16 %v616, %v609
  %v771 = vpack.c.b16 %v617, %v610
  %v772 = vpack.c.b16 %v618, %v611
  %v773 = vpack.c.b16 %v626, %v619
  %v774 = vpack.c.b16 %v627, %v620
  %v775 = vpack.c.b16 %v628, %v621
  %v776 = vpack.c.b16 %v629, %v622
  %v777 = vpack.c.b16 %v630, %v623
  %v778 = vpack.c.b16 %v631, %v624
  %v779 = vpack.c.b16 %v632, %v625
  %v780 = vpack.c.b16 %v640, %v633
  %v781 = vpack.c.b16 %v641, %v634
  %v782 = vpack.c.b16 %v642, %v635
  %v783 = vpack.c.b16 %v643, %v636
  %v784 = vpack.c.b16 %v644, %v637
  %v785 = vpack.c.b16 %v645, %v638
  %v786 = vpack.c.b16 %v646, %v639
  %v787 = vpack.c.b16 %v654, %v647
  %v788 = vpack.c.b16 %v655, %v648
  %v789 = vpack.c.b16 %v656, %v649
  %v790 = vpack.c.b16 %v657, %v650
  %v791 = vpack.c.b16 %v658, %v651
  %v792 = vpack.c.b16 %v659, %v652
  %v793 = vpack.c.b16 %v660, %v653
  %v794 = vpack.c.b16 %v668, %v661
  %v795 = vpack.c.b16 %v669, %v662
  %v796 = vpack.c.b16 %v670, %v663
  %v797 = vpack.c.b16 %v671, %v664
  %v798 = vpack.c.b16 %v672, %v665
  %v799 = vpack.c.b16 %v673, %v666
  %v800 = vpack.c.b16 %v674, %v667
  %v801 = vpack.c.b16 %v682, %v675
  %v802 = vpack.c.b16 %v683, %v676
  %v803 = vpack.c.b16 %v684, %v677
  %v804 = vpack.c.b16 %v685, %v678
  %v805 = vpack.c.b16 %v686, %v679
  %v806 = vpack.c.b16 %v687, %v680
  %v807 = vpack.c.b16 %v688, %v681
  %v808 = vpack.c.b16 %v696, %v689
  %v809 = vpack.c.b16 %v697, %v690
  %v810 = vpack.c.b16 %v698, %v691
  %v811 = vpack.c.b16 %v699, %v692
  %v812 = vpack.c.b16 %v700, %v693
  %v813 = vpack.c.b16 %v701, %v694
  %v814 = vpack.c.b16 %v702, %v695
  %927 = vmatpush.bf16.msra.mxu0 %v752
  %928 = vmatpush.bf16.msra.mxu0 %v745
  %929 = vmatpush.bf16.msra.mxu0 %v738
  %930 = vmatpush.bf16.msra.mxu0 %v731
  %931 = vmatpush.bf16.msra.mxu0 %v724
  %932 = vmatpush.bf16.msra.mxu0 %v717
  %933 = vmatpush.bf16.msra.mxu0 %v710
  %934 = vmatpush.bf16.msra.mxu0 %v703
  %935 = vmatmul.bf16.gmra.mxu0 %v205
  %v936 = vpop.f32.mrf.mxu0
  %v937 = vadd.f32 %v337, %v936
  %v938 = vpop.f32.mrf.mxu0
  %v939 = vadd.f32 %v337, %v938
  %940 = vdwg.mxu0
  %941 = vmatpush.bf16.msra.mxu0 %v808
  %942 = vmatpush.bf16.msra.mxu0 %v801
  %943 = vmatpush.bf16.msra.mxu0 %v794
  %944 = vmatpush.bf16.msra.mxu0 %v787
  %945 = vmatpush.bf16.msra.mxu0 %v780
  %946 = vmatpush.bf16.msra.mxu0 %v773
  %947 = vmatpush.bf16.msra.mxu0 %v766
  %948 = vmatpush.bf16.msra.mxu0 %v759
  %949 = vmatmul.bf16.gmra.mxu0 %v206
  %v950 = vpop.f32.mrf.mxu0
  %v951 = vadd.f32 %v937, %v950
  %v952 = vpop.f32.mrf.mxu0
  %v953 = vadd.f32 %v939, %v952
  %954 = vdwg.mxu0
  %955 = vmatpush.bf16.msra.mxu0 %v753
  %956 = vmatpush.bf16.msra.mxu0 %v746
  %957 = vmatpush.bf16.msra.mxu0 %v739
  %958 = vmatpush.bf16.msra.mxu0 %v732
  %959 = vmatpush.bf16.msra.mxu0 %v725
  %960 = vmatpush.bf16.msra.mxu0 %v718
  %961 = vmatpush.bf16.msra.mxu0 %v711
  %962 = vmatpush.bf16.msra.mxu0 %v704
  %963 = vmatmul.bf16.gmra.mxu0 %v205
  %v964 = vpop.f32.mrf.mxu0
  %v965 = vadd.f32 %v338, %v964
  %v966 = vpop.f32.mrf.mxu0
  %v967 = vadd.f32 %v338, %v966
  %968 = vdwg.mxu0
  %969 = vmatpush.bf16.msra.mxu0 %v809
  %970 = vmatpush.bf16.msra.mxu0 %v802
  %971 = vmatpush.bf16.msra.mxu0 %v795
  %972 = vmatpush.bf16.msra.mxu0 %v788
  %973 = vmatpush.bf16.msra.mxu0 %v781
  %974 = vmatpush.bf16.msra.mxu0 %v774
  %975 = vmatpush.bf16.msra.mxu0 %v767
  %976 = vmatpush.bf16.msra.mxu0 %v760
  %977 = vmatmul.bf16.gmra.mxu0 %v206
  %v978 = vpop.f32.mrf.mxu0
  %v979 = vadd.f32 %v965, %v978
  %v980 = vpop.f32.mrf.mxu0
  %v981 = vadd.f32 %v967, %v980
  %982 = vdwg.mxu0
  %983 = vmatpush.bf16.msra.mxu0 %v754
  %984 = vmatpush.bf16.msra.mxu0 %v747
  %985 = vmatpush.bf16.msra.mxu0 %v740
  %986 = vmatpush.bf16.msra.mxu0 %v733
  %987 = vmatpush.bf16.msra.mxu0 %v726
  %988 = vmatpush.bf16.msra.mxu0 %v719
  %989 = vmatpush.bf16.msra.mxu0 %v712
  %990 = vmatpush.bf16.msra.mxu0 %v705
  %991 = vmatmul.bf16.gmra.mxu0 %v205
  %v992 = vpop.f32.mrf.mxu0
  %v993 = vadd.f32 %v339, %v992
  %v994 = vpop.f32.mrf.mxu0
  %v995 = vadd.f32 %v339, %v994
  %996 = vdwg.mxu0
  %997 = vmatpush.bf16.msra.mxu0 %v810
  %998 = vmatpush.bf16.msra.mxu0 %v803
  %999 = vmatpush.bf16.msra.mxu0 %v796
  %1000 = vmatpush.bf16.msra.mxu0 %v789
  %1001 = vmatpush.bf16.msra.mxu0 %v782
  %1002 = vmatpush.bf16.msra.mxu0 %v775
  %1003 = vmatpush.bf16.msra.mxu0 %v768
  %1004 = vmatpush.bf16.msra.mxu0 %v761
  %1005 = vmatmul.bf16.gmra.mxu0 %v206
  %v1006 = vpop.f32.mrf.mxu0
  %v1007 = vadd.f32 %v993, %v1006
  %v1008 = vpop.f32.mrf.mxu0
  %v1009 = vadd.f32 %v995, %v1008
  %1010 = vdwg.mxu0
  %1011 = vmatpush.bf16.msra.mxu0 %v755
  %1012 = vmatpush.bf16.msra.mxu0 %v748
  %1013 = vmatpush.bf16.msra.mxu0 %v741
  %1014 = vmatpush.bf16.msra.mxu0 %v734
  %1015 = vmatpush.bf16.msra.mxu0 %v727
  %1016 = vmatpush.bf16.msra.mxu0 %v720
  %1017 = vmatpush.bf16.msra.mxu0 %v713
  %1018 = vmatpush.bf16.msra.mxu0 %v706
  %1019 = vmatmul.bf16.gmra.mxu0 %v205
  %v1020 = vpop.f32.mrf.mxu0
  %v1021 = vadd.f32 %v340, %v1020
  %v1022 = vpop.f32.mrf.mxu0
  %v1023 = vadd.f32 %v340, %v1022
  %1024 = vdwg.mxu0
  %1025 = vmatpush.bf16.msra.mxu0 %v811
  %1026 = vmatpush.bf16.msra.mxu0 %v804
  %1027 = vmatpush.bf16.msra.mxu0 %v797
  %1028 = vmatpush.bf16.msra.mxu0 %v790
  %1029 = vmatpush.bf16.msra.mxu0 %v783
  %1030 = vmatpush.bf16.msra.mxu0 %v776
  %1031 = vmatpush.bf16.msra.mxu0 %v769
  %1032 = vmatpush.bf16.msra.mxu0 %v762
  %1033 = vmatmul.bf16.gmra.mxu0 %v206
  %v1034 = vpop.f32.mrf.mxu0
  %v1035 = vadd.f32 %v1021, %v1034
  %v1036 = vpop.f32.mrf.mxu0
  %v1037 = vadd.f32 %v1023, %v1036
  %1038 = vdwg.mxu0
  %1039 = vmatpush.bf16.msra.mxu0 %v756
  %1040 = vmatpush.bf16.msra.mxu0 %v749
  %1041 = vmatpush.bf16.msra.mxu0 %v742
  %1042 = vmatpush.bf16.msra.mxu0 %v735
  %1043 = vmatpush.bf16.msra.mxu0 %v728
  %1044 = vmatpush.bf16.msra.mxu0 %v721
  %1045 = vmatpush.bf16.msra.mxu0 %v714
  %1046 = vmatpush.bf16.msra.mxu0 %v707
  %1047 = vmatmul.bf16.gmra.mxu0 %v205
  %v1048 = vpop.f32.mrf.mxu0
  %v1049 = vadd.f32 %v341, %v1048
  %v1050 = vpop.f32.mrf.mxu0
  %v1051 = vadd.f32 %v341, %v1050
  %1052 = vdwg.mxu0
  %1053 = vmatpush.bf16.msra.mxu0 %v812
  %1054 = vmatpush.bf16.msra.mxu0 %v805
  %1055 = vmatpush.bf16.msra.mxu0 %v798
  %1056 = vmatpush.bf16.msra.mxu0 %v791
  %1057 = vmatpush.bf16.msra.mxu0 %v784
  %1058 = vmatpush.bf16.msra.mxu0 %v777
  %1059 = vmatpush.bf16.msra.mxu0 %v770
  %1060 = vmatpush.bf16.msra.mxu0 %v763
  %1061 = vmatmul.bf16.gmra.mxu0 %v206
  %v1062 = vpop.f32.mrf.mxu0
  %v1063 = vadd.f32 %v1049, %v1062
  %v1064 = vpop.f32.mrf.mxu0
  %v1065 = vadd.f32 %v1051, %v1064
  %1066 = vdwg.mxu0
  %1067 = vmatpush.bf16.msra.mxu0 %v757
  %1068 = vmatpush.bf16.msra.mxu0 %v750
  %1069 = vmatpush.bf16.msra.mxu0 %v743
  %1070 = vmatpush.bf16.msra.mxu0 %v736
  %1071 = vmatpush.bf16.msra.mxu0 %v729
  %1072 = vmatpush.bf16.msra.mxu0 %v722
  %1073 = vmatpush.bf16.msra.mxu0 %v715
  %1074 = vmatpush.bf16.msra.mxu0 %v708
  %1075 = vmatmul.bf16.gmra.mxu0 %v205
  %v1076 = vpop.f32.mrf.mxu0
  %v1077 = vadd.f32 %v342, %v1076
  %v1078 = vpop.f32.mrf.mxu0
  %v1079 = vadd.f32 %v342, %v1078
  %1080 = vdwg.mxu0
  %1081 = vmatpush.bf16.msra.mxu0 %v813
  %1082 = vmatpush.bf16.msra.mxu0 %v806
  %1083 = vmatpush.bf16.msra.mxu0 %v799
  %1084 = vmatpush.bf16.msra.mxu0 %v792
  %1085 = vmatpush.bf16.msra.mxu0 %v785
  %1086 = vmatpush.bf16.msra.mxu0 %v778
  %1087 = vmatpush.bf16.msra.mxu0 %v771
  %1088 = vmatpush.bf16.msra.mxu0 %v764
  %1089 = vmatmul.bf16.gmra.mxu0 %v206
  %v1090 = vpop.f32.mrf.mxu0
  %v1091 = vadd.f32 %v1077, %v1090
  %v1092 = vpop.f32.mrf.mxu0
  %v1093 = vadd.f32 %v1079, %v1092
  %1094 = vdwg.mxu0
  %1095 = vmatpush.bf16.msra.mxu0 %v758
  %1096 = vmatpush.bf16.msra.mxu0 %v751
  %1097 = vmatpush.bf16.msra.mxu0 %v744
  %1098 = vmatpush.bf16.msra.mxu0 %v737
  %1099 = vmatpush.bf16.msra.mxu0 %v730
  %1100 = vmatpush.bf16.msra.mxu0 %v723
  %1101 = vmatpush.bf16.msra.mxu0 %v716
  %1102 = vmatpush.bf16.msra.mxu0 %v709
  %1103 = vmatmul.bf16.gmra.mxu0 %v205
  %v1104 = vpop.f32.mrf.mxu0
  %v1105 = vadd.f32 %v343, %v1104
  %v1106 = vpop.f32.mrf.mxu0
  %v1107 = vadd.f32 %v343, %v1106
  %1108 = vdwg.mxu0
  %1109 = vmatpush.bf16.msra.mxu0 %v814
  %1110 = vmatpush.bf16.msra.mxu0 %v807
  %1111 = vmatpush.bf16.msra.mxu0 %v800
  %1112 = vmatpush.bf16.msra.mxu0 %v793
  %1113 = vmatpush.bf16.msra.mxu0 %v786
  %1114 = vmatpush.bf16.msra.mxu0 %v779
  %1115 = vmatpush.bf16.msra.mxu0 %v772
  %1116 = vmatpush.bf16.msra.mxu0 %v765
  %1117 = vmatmul.bf16.gmra.mxu0 %v206
  %v1118 = vpop.f32.mrf.mxu0
  %v1119 = vadd.f32 %v1105, %v1118
  %v1120 = vpop.f32.mrf.mxu0
  %v1121 = vadd.f32 %v1107, %v1120
  %1122 = vdwg.mxu0
  %v1123 = vmax.f32 %v951, 0.0
  %v1124 = vmax.f32 %v979, 0.0
  %v1125 = vmax.f32 %v1007, 0.0
  %v1126 = vmax.f32 %v1035, 0.0
  %v1127 = vmax.f32 %v1063, 0.0
  %v1128 = vmax.f32 %v1091, 0.0
  %v1129 = vmax.f32 %v1119, 0.0
  %v1130 = vmax.f32 %v953, 0.0
  %v1131 = vmax.f32 %v981, 0.0
  %v1132 = vmax.f32 %v1009, 0.0
  %v1133 = vmax.f32 %v1037, 0.0
  %v1134 = vmax.f32 %v1065, 0.0
  %v1135 = vmax.f32 %v1093, 0.0
  %v1136 = vmax.f32 %v1121, 0.0
  %1137 = vst [vmem:[%s7] sm:$0xff] %v1123
  %1138 = vst [vmem:[%s7 + $0x8] sm:$0xff] %v1124
  %1139 = vst [vmem:[%s7 + $0x10] sm:$0xff] %v1125
  %1140 = vst [vmem:[%s7 + $0x18] sm:$0xff] %v1126
  %1141 = vst [vmem:[%s7 + $0x20] sm:$0xff] %v1127
  %1142 = vst [vmem:[%s7 + $0x28] sm:$0xff] %v1128
  %vm1143 = vcmask 130048
  %1144 = vst.msk [vmem:[%s7 + $0x30] sm:$0xff] %vm1143, %v1129
  %1145 = vst [vmem:[%s7 + $0x38] sm:$0xff] %v1130
  %1146 = vst [vmem:[%s7 + $0x40] sm:$0xff] %v1131
  %1147 = vst [vmem:[%s7 + $0x48] sm:$0xff] %v1132
  %1148 = vst [vmem:[%s7 + $0x50] sm:$0xff] %v1133
  %1149 = vst [vmem:[%s7 + $0x58] sm:$0xff] %v1134
  %1150 = vst [vmem:[%s7 + $0x60] sm:$0xff] %v1135
  %1151 = vst.msk [vmem:[%s7 + $0x68] sm:$0xff] %vm1143, %v1136
  // Predicated region
  $region30: #{decoder_forward.1} parent=0 // pred_check
    _
  $region31: #{decoder_forward.1} parent=0 // pred_check_branch
    %1153 = sbr.rel (0) target = $region33
  $region32: #{decoder_forward.1} parent=0 // pred_region
    _
  $region33: #{decoder_forward.1} parent=0 // pred_fallthru
    _
  // Predicated region
  $region34: #{decoder_forward.1} parent=0 // pred_check
    _
  $region35: #{decoder_forward.1} parent=0 // pred_check_branch
    %1155 = sbr.rel (0) target = $region37
  $region36: #{decoder_forward.1} parent=0 // pred_region
    _
  $region37: #{decoder_forward.1} parent=0 // pred_fallthru
    _

</llo_original>
